<compile_context>
chip_gen: v5e
topology: v5e:2x2
jax: 0.10.0
libtpu: 0.0.40
codegen_flags: <defaults>
</compile_context>

<pallas_src>
import functools

import jax
import jax.numpy as jnp
from jax import lax
from jax.experimental import pallas as pl
from jax.experimental.pallas import tpu as pltpu

EPS = 1e-5


def _upconv_bn_relu_kernel(x2_ref, gh_ref, uw_ref, selt_ref, gb_ref, o_ref,
                           *, n, w_in, w2, h2, c_blk, k):
    z_blk = c_blk * h2
    mm_dtype = x2_ref.dtype

    # ---- stage 1: one wide MXU matmul over C_in*H; lanes of s are (kx, o_local, p) --------
    s = jnp.dot(x2_ref[...], gh_ref[...], preferred_element_type=jnp.float32)  # (n*w, k*z_blk)
    s = s.astype(mm_dtype)                                    # single downcast for stage 2

    # ---- stage 2: ONE batched MXU matmul, contraction over (kx, w_in) = 3*W ---------------
    # lane-aligned slices (multiples of 128) -> concatenate along the contraction axis.
    parts = [s[:, kx * z_blk:(kx + 1) * z_blk].reshape(n, w_in, z_blk) for kx in range(k)]
    s_cat = jnp.concatenate(parts, axis=1)                    # (n, k*w_in, z_blk), rows (kx, wi)
    uw_b = jnp.broadcast_to(uw_ref[...][None], (n, w2, k * w_in))   # in-register N broadcast
    y = lax.dot_general(uw_b, s_cat,
                        dimension_numbers=(((2,), (1,)), ((0,), (0,))),
                        preferred_element_type=jnp.float32)   # (n, w2, z_blk)
    y = y.reshape(n * w2, z_blk)                              # rows (n, q), lanes (o_local, p)

    # conv bias intentionally dropped: training-mode BN subtracts the batch mean,
    # cancelling it exactly (variance is shift-invariant), so this is rounding-only.

    # ---- BatchNorm2d (batch stats, biased variance) + ReLU: single pass over y ------------
    cnt = jnp.float32(n * w2 * h2)
    mom = jnp.concatenate([jnp.sum(y, axis=0, keepdims=True),
                           jnp.sum(y * y, axis=0, keepdims=True)], axis=0)     # (2, z_blk)
    # fused per-channel reduce (contract the z axis of selt) and broadcast-back
    mom_c = lax.dot_general(mom, selt_ref[...],
                            dimension_numbers=(((1,), (1,)), ((), ())),
                            preferred_element_type=jnp.float32) / cnt          # (2, c_blk)
    mom_l = jnp.dot(mom_c, selt_ref[...], preferred_element_type=jnp.float32)  # (2, z_blk)
    mean_l = mom_l[0:1]
    var_l = mom_l[1:2] - mean_l * mean_l
    scale_l = gb_ref[0:1, :] * lax.rsqrt(var_l + EPS)          # gamma (lane layout)
    shift_l = gb_ref[1:2, :] - mean_l * scale_l                # beta - mean*scale
    o_ref[...] = jnp.maximum(y * scale_l + shift_l, 0.0)


def _interp_matrix(n_in, n_out):
    """Row-stochastic 1-D bilinear interpolation matrix, align_corners=True."""
    src = jnp.arange(n_out, dtype=jnp.float32) * (n_in - 1) / (n_out - 1)
    i0 = jnp.floor(src).astype(jnp.int32)
    i1 = jnp.minimum(i0 + 1, n_in - 1)
    frac = src - i0.astype(jnp.float32)
    m = jnp.zeros((n_out, n_in), jnp.float32)
    m = m.at[jnp.arange(n_out), i0].add(1.0 - frac)
    m = m.at[jnp.arange(n_out), i1].add(frac)
    return m


def _shifted_interp(n_in, n_out, k, pad=1):
    """k row-shifted copies of the interp matrix; zero rows where the 3x3 conv's padding
    would read outside the upsampled image: S[j][p, :] = U[p + j - pad, :] or 0."""
    u = _interp_matrix(n_in, n_out)
    u_pad = jnp.pad(u, ((pad, pad), (0, 0)))
    return jnp.stack([u_pad[j:j + n_out] for j in range(k)], axis=0)  # (k, n_out, n_in)


def up_conv_bn_relu(x, w, b, gamma, beta, *, compute_dtype=jnp.bfloat16):
    """x: (N, C_in, H, W) NCHW; w: (C_out, C_in, 3, 3); b/gamma/beta: (C_out,)."""
    n, c_in, h, w_in = x.shape
    c_out, c_in2, k, k2 = w.shape
    assert c_in2 == c_in and k == k2 == 3
    h2, w2 = 2 * h, 2 * w_in
    z = c_out * h2
    del b  # exactly cancelled by training-mode BatchNorm (mean subtraction)

    # Channel-group tiling: whole channels per block (exact in-kernel BN stats), lane block
    # a multiple of 128 when the shape allows; fall back to a single block otherwise.
    n_groups = 1
    for g in range(c_out, 0, -1):
        if c_out % g == 0 and ((c_out // g) * h2) % 128 == 0:
            n_groups = g
            break
    c_blk = c_out // n_groups
    z_blk = c_blk * h2

    uh_s = _shifted_interp(h, h2, k)        # (k, H2, H)  — ky taps + H-upsample + zero pad
    uw_s = _shifted_interp(w_in, w2, k)     # (k, W2, W)  — kx taps + W-upsample + zero pad

    # Fold {channel mixing, ky taps, H-upsample, pad} into Gh with columns ordered
    # (channel group, kx, o_local, p) so each channel group is one contiguous lane block.
    gh = jnp.einsum('ocyx,yph->chxop', w.astype(jnp.float32), uh_s)   # (c_in, h, k, c_out, h2)
    gh = gh.reshape(c_in, h, k, n_groups, c_blk, h2).transpose(0, 1, 3, 2, 4, 5)
    gh = gh.reshape(c_in * h, n_groups * k * z_blk).astype(compute_dtype)

    # W-direction weights folded over the 3 kx taps: (W2, 3*W); N-broadcast happens in-kernel.
    uw_cat = uw_s.transpose(1, 0, 2).reshape(w2, k * w_in).astype(compute_dtype)

    # Activations: rows=(n, w), lanes=(c, h).
    # TODO(synk): at decoder scale keep a (n,w,c,h)-style layout across blocks so this
    # transpose and the output transpose below fold into the neighboring kernels.
    x2 = jnp.transpose(x, (0, 3, 1, 2)).reshape(n * w_in, c_in * h).astype(compute_dtype)

    # Per-block 0/1 selector (identical for every channel group): (c_blk, z_blk), lane-dense.
    selt = jnp.repeat(jnp.eye(c_blk, dtype=jnp.float32), h2, axis=1)

    # [gamma; beta] pre-expanded to lane layout (o, p): (2, z).
    gb = jnp.stack([jnp.repeat(gamma.astype(jnp.float32), h2),
                    jnp.repeat(beta.astype(jnp.float32), h2)], axis=0)

    kern = functools.partial(_upconv_bn_relu_kernel,
                             n=n, w_in=w_in, w2=w2, h2=h2, c_blk=c_blk, k=k)

    grid_spec = pltpu.PrefetchScalarGridSpec(
        num_scalar_prefetch=0,
        grid=(n_groups,),
        in_specs=[
            pl.BlockSpec((n * w_in, c_in * h), lambda g: (0, 0)),    # x2: shared across groups
            pl.BlockSpec((c_in * h, k * z_blk), lambda g: (0, g)),   # Gh: per channel group
            pl.BlockSpec((w2, k * w_in), lambda g: (0, 0)),          # Uw (folded kx): shared
            pl.BlockSpec((c_blk, z_blk), lambda g: (0, 0)),          # selector: shared
            pl.BlockSpec((2, z_blk), lambda g: (0, g)),              # [gamma; beta] lanes
        ],
        out_specs=pl.BlockSpec((n * w2, z_blk), lambda g: (0, g)),
    )

    out2d = pl.pallas_call(
        kern,
        out_shape=jax.ShapeDtypeStruct((n * w2, z), jnp.float32),
        grid_spec=grid_spec,
        compiler_params=pltpu.CompilerParams(
            dimension_semantics=("parallel",),          # v7x: TCs split channel groups
            vmem_limit_bytes=32 * 1024 * 1024),
    )(x2, gh, uw_cat, selt, gb)

    # (N*W2, C_out*H2) -> (N, C_out, H2, W2): wrapper-side layout glue (see TODO above).
    return out2d.reshape(n, w2, c_out, h2).transpose(0, 2, 3, 1)


# ---------------- pure-JAX reference (mirrors PyTorch semantics) ----------------
def ref_forward(x, w, b, gamma, beta):
    N, C_in, H, W = x.shape
    C_out, _, K, _ = w.shape
    H2, W2 = 2 * H, 2 * W

    def upsample1d(a, axis, n_out):
        n_in = a.shape[axis]
        src = jnp.arange(n_out, dtype=jnp.float32) * (n_in - 1) / (n_out - 1)
        i0 = jnp.floor(src).astype(jnp.int32)
        i1 = jnp.minimum(i0 + 1, n_in - 1)
        frac = src - i0.astype(jnp.float32)
        a0 = jnp.take(a, i0, axis=axis)
        a1 = jnp.take(a, i1, axis=axis)
        shp = [1] * a.ndim
        shp[axis] = n_out
        fr = frac.reshape(shp)
        return a0 * (1.0 - fr) + a1 * fr

    up = upsample1d(x, 2, H2)
    up = upsample1d(up, 3, W2)
    pad = jnp.pad(up, ((0, 0), (0, 0), (1, 1), (1, 1)))
    y = jnp.zeros((N, C_out, H2, W2), jnp.float32)
    for ky in range(K):
        for kx in range(K):
            patch = pad[:, :, ky:ky + H2, kx:kx + W2]
            y = y + jnp.einsum('oc,ncpq->nopq', w[:, :, ky, kx], patch,
                               precision=lax.Precision.HIGHEST)
    y = y + b[None, :, None, None]
    mu = jnp.mean(y, axis=(0, 2, 3), keepdims=True)
    var = jnp.mean((y - mu) ** 2, axis=(0, 2, 3), keepdims=True)
    y = gamma[None, :, None, None] * (y - mu) / jnp.sqrt(var + EPS) + beta[None, :, None, None]
    return jnp.maximum(y, 0.0)


if __name__ == "__main__":
    N, C_in, C_out, H, W, K = 2, 4, 8, 16, 16, 3

    key = jax.random.PRNGKey(0)
    kx_, kw_, kb_, kg_, kbe_ = jax.random.split(key, 5)
    x = jax.random.normal(kx_, (N, C_in, H, W), jnp.float32)
    w = jax.random.normal(kw_, (C_out, C_in, K, K), jnp.float32) / jnp.sqrt(C_in * K * K)
    b = 0.1 * jax.random.normal(kb_, (C_out,), jnp.float32)
    gamma = 1.0 + 0.1 * jax.random.normal(kg_, (C_out,), jnp.float32)
    beta = 0.1 * jax.random.normal(kbe_, (C_out,), jnp.float32)

    ref = jax.block_until_ready(ref_forward(x, w, b, gamma, beta))

    # exact path (f32 MXU matmuls)
    out_f32 = jax.block_until_ready(
        up_conv_bn_relu(x, w, b, gamma, beta, compute_dtype=jnp.float32))
    assert out_f32.shape == (N, C_out, 2 * H, 2 * W), out_f32.shape
    err_f32 = float(jnp.max(jnp.abs(out_f32 - ref)))
    assert err_f32 < 5e-3, f"f32 path max abs error vs reference: {err_f32}"

    # fast path (bf16 operands / f32 accumulation); looser tolerance because
    # align_corners=True interpolation weights are not exactly representable in bf16.
    out_bf16 = jax.block_until_ready(
        up_conv_bn_relu(x, w, b, gamma, beta, compute_dtype=jnp.bfloat16))
    assert out_bf16.shape == (N, C_out, 2 * H, 2 * W), out_bf16.shape
    err_bf16 = float(jnp.max(jnp.abs(out_bf16 - ref)))
    assert err_bf16 < 3e-2, f"bf16 path max abs error vs reference: {err_bf16}"

    print("KERNEL_OK")
</pallas_src>

<mosaic_0001>
module attributes {stable_mosaic.version = 11 : i64} {
  func.func @_upconv_bn_relu_kernel(%arg0: i32, %arg1: memref<32x64xf32, #tpu.memory_space<vmem>>, %arg2: memref<64x384xf32, #tpu.memory_space<vmem>>, %arg3: memref<32x48xf32, #tpu.memory_space<vmem>>, %arg4: memref<4x128xf32, #tpu.memory_space<vmem>>, %arg5: memref<2x128xf32, #tpu.memory_space<vmem>>, %arg6: memref<64x128xf32, #tpu.memory_space<vmem>>) attributes {dimension_semantics = [#tpu.dimension_semantics<parallel>], iteration_bounds = array<i64: 2>, scalar_prefetch = 0 : i64, scratch_operands = 0 : i64, tpu.core_type = #tpu.core_type<tc>, window_params = [{pipeline_mode = #tpu.pipeline_mode<synchronous>, transform_indices = @transform_0, window_bounds = array<i64: 32, 64>}, {transform_indices = @transform_1, window_bounds = array<i64: 64, 384>}, {pipeline_mode = #tpu.pipeline_mode<synchronous>, transform_indices = @transform_2, window_bounds = array<i64: 32, 48>}, {pipeline_mode = #tpu.pipeline_mode<synchronous>, transform_indices = @transform_3, window_bounds = array<i64: 4, 128>}, {transform_indices = @transform_4, window_bounds = array<i64: 2, 128>}, {transform_indices = @transform_5, window_bounds = array<i64: 64, 128>}]} {
    %c0 = arith.constant 0 : index
    %c0_0 = arith.constant 0 : index
    %0 = vector.load %arg1[%c0, %c0_0] : memref<32x64xf32, #tpu.memory_space<vmem>>, vector<32x64xf32>
    %c0_1 = arith.constant 0 : index
    %c0_2 = arith.constant 0 : index
    %1 = vector.load %arg2[%c0_1, %c0_2] : memref<64x384xf32, #tpu.memory_space<vmem>>, vector<64x384xf32>
    %cst = arith.constant dense<0.000000e+00> : vector<32x384xf32>
    %2 = tpu.matmul %0, %1, %cst {dimension_numbers = #tpu.dot_dimension_numbers<[1], [0], [0], [1], [0, 0, 1, 1], [], []>} : vector<32x64xf32>, vector<64x384xf32>, vector<32x384xf32> -> vector<32x384xf32>
    %3 = vector.extract_strided_slice %2 {offsets = [0, 0], sizes = [32, 128], strides = [1, 1]} : vector<32x384xf32> to vector<32x128xf32>
    %4 = vector.shape_cast %3 : vector<32x128xf32> to vector<2x16x128xf32>
    %5 = vector.extract_strided_slice %2 {offsets = [0, 128], sizes = [32, 128], strides = [1, 1]} : vector<32x384xf32> to vector<32x128xf32>
    %6 = vector.shape_cast %5 : vector<32x128xf32> to vector<2x16x128xf32>
    %7 = vector.extract_strided_slice %2 {offsets = [0, 256], sizes = [32, 128], strides = [1, 1]} : vector<32x384xf32> to vector<32x128xf32>
    %8 = vector.shape_cast %7 : vector<32x128xf32> to vector<2x16x128xf32>
    %9 = tpu.concatenate %4, %6, %8 in 1 : vector<2x16x128xf32>, vector<2x16x128xf32>, vector<2x16x128xf32> -> vector<2x48x128xf32>
    %c0_3 = arith.constant 0 : index
    %c0_4 = arith.constant 0 : index
    %10 = vector.load %arg3[%c0_3, %c0_4] : memref<32x48xf32, #tpu.memory_space<vmem>>, vector<32x48xf32>
    %11 = vector.shape_cast %10 : vector<32x48xf32> to vector<1x32x48xf32>
    %12 = vector.shape_cast %11 : vector<1x32x48xf32> to vector<1x32x48xf32>
    %13 = vector.broadcast %12 : vector<1x32x48xf32> to vector<2x32x48xf32>
    %cst_5 = arith.constant dense<0.000000e+00> : vector<2x32x128xf32>
    %14 = tpu.matmul %13, %9, %cst_5 {dimension_numbers = #tpu.dot_dimension_numbers<[2], [1], [1], [2], [0, 0, 0, 1, 1, 2], [0], [0]>} : vector<2x32x48xf32>, vector<2x48x128xf32>, vector<2x32x128xf32> -> vector<2x32x128xf32>
    %15 = vector.shape_cast %14 : vector<2x32x128xf32> to vector<64x128xf32>
    %cst_6 = arith.constant dense<0.000000e+00> : vector<128xf32>
    %16 = vector.multi_reduction <add>, %15, %cst_6 [0] : vector<64x128xf32> to vector<128xf32>
    %17 = vector.shape_cast %16 : vector<128xf32> to vector<1x128xf32>
    %18 = arith.mulf %15, %15 : vector<64x128xf32>
    %cst_7 = arith.constant dense<0.000000e+00> : vector<128xf32>
    %19 = vector.multi_reduction <add>, %18, %cst_7 [0] : vector<64x128xf32> to vector<128xf32>
    %20 = vector.shape_cast %19 : vector<128xf32> to vector<1x128xf32>
    %21 = tpu.concatenate %17, %20 in 0 : vector<1x128xf32>, vector<1x128xf32> -> vector<2x128xf32>
    %c0_8 = arith.constant 0 : index
    %c0_9 = arith.constant 0 : index
    %22 = vector.load %arg4[%c0_8, %c0_9] : memref<4x128xf32, #tpu.memory_space<vmem>>, vector<4x128xf32>
    %cst_10 = arith.constant dense<0.000000e+00> : vector<2x4xf32>
    %23 = tpu.matmul %21, %22, %cst_10 {dimension_numbers = #tpu.dot_dimension_numbers<[1], [1], [0], [0], [0, 0, 1, 0], [], []>} : vector<2x128xf32>, vector<4x128xf32>, vector<2x4xf32> -> vector<2x4xf32>
    %cst_11 = arith.constant 2.048000e+03 : f32
    %24 = vector.broadcast %cst_11 : f32 to vector<2x4xf32>
    %25 = arith.divf %23, %24 : vector<2x4xf32>
    %c0_12 = arith.constant 0 : index
    %c0_13 = arith.constant 0 : index
    %26 = vector.load %arg4[%c0_12, %c0_13] : memref<4x128xf32, #tpu.memory_space<vmem>>, vector<4x128xf32>
    %cst_14 = arith.constant dense<0.000000e+00> : vector<2x128xf32>
    %27 = tpu.matmul %25, %26, %cst_14 {dimension_numbers = #tpu.dot_dimension_numbers<[1], [0], [0], [1], [0, 0, 1, 1], [], []>} : vector<2x4xf32>, vector<4x128xf32>, vector<2x128xf32> -> vector<2x128xf32>
    %28 = vector.extract_strided_slice %27 {offsets = [0, 0], sizes = [1, 128], strides = [1, 1]} : vector<2x128xf32> to vector<1x128xf32>
    %29 = vector.extract_strided_slice %27 {offsets = [1, 0], sizes = [1, 128], strides = [1, 1]} : vector<2x128xf32> to vector<1x128xf32>
    %30 = arith.mulf %28, %28 : vector<1x128xf32>
    %31 = arith.subf %29, %30 : vector<1x128xf32>
    %c0_15 = arith.constant 0 : index
    %c0_16 = arith.constant 0 : index
    %32 = vector.load %arg5[%c0_15, %c0_16] : memref<2x128xf32, #tpu.memory_space<vmem>>, vector<1x128xf32>
    %cst_17 = arith.constant 9.99999974E-6 : f32
    %33 = vector.broadcast %cst_17 : f32 to vector<1x128xf32>
    %34 = arith.addf %31, %33 : vector<1x128xf32>
    %35 = math.rsqrt %34 : vector<1x128xf32>
    %36 = arith.mulf %32, %35 : vector<1x128xf32>
    %c1 = arith.constant 1 : index
    %c0_18 = arith.constant 0 : index
    %37 = vector.load %arg5[%c1, %c0_18] : memref<2x128xf32, #tpu.memory_space<vmem>>, vector<1x128xf32>
    %38 = arith.mulf %28, %36 : vector<1x128xf32>
    %39 = arith.subf %37, %38 : vector<1x128xf32>
    %40 = vector.broadcast %36 : vector<1x128xf32> to vector<64x128xf32>
    %41 = arith.mulf %15, %40 : vector<64x128xf32>
    %42 = vector.broadcast %39 : vector<1x128xf32> to vector<64x128xf32>
    %43 = arith.addf %41, %42 : vector<64x128xf32>
    %cst_19 = arith.constant 0.000000e+00 : f32
    %44 = vector.broadcast %cst_19 : f32 to vector<64x128xf32>
    %45 = arith.maximumf %43, %44 : vector<64x128xf32>
    %c0_20 = arith.constant 0 : index
    %c0_21 = arith.constant 0 : index
    %46 = vector.load %arg6[%c0_20, %c0_21] : memref<64x128xf32, #tpu.memory_space<vmem>>, vector<64x128xf32>
    tpu.vector_store %arg6[%c0_20, %c0_21], %45 {strides = array<i32>} : memref<64x128xf32, #tpu.memory_space<vmem>>, vector<64x128xf32>,
    return
  }
  func.func @transform_0(%arg0: i32) -> (i32, i32) {
    %c0_i32 = arith.constant 0 : i32
    %c0_i32_0 = arith.constant 0 : i32
    %c0_i32_1 = arith.constant 0 : i32
    return %c0_i32, %c0_i32_0 : i32, i32
  }
  func.func @transform_1(%arg0: i32) -> (i32, i32) {
    %c0_i32 = arith.constant 0 : i32
    %c0_i32_0 = arith.constant 0 : i32
    return %c0_i32, %arg0 : i32, i32
  }
  func.func @transform_2(%arg0: i32) -> (i32, i32) {
    %c0_i32 = arith.constant 0 : i32
    %c0_i32_0 = arith.constant 0 : i32
    %c0_i32_1 = arith.constant 0 : i32
    return %c0_i32, %c0_i32_0 : i32, i32
  }
  func.func @transform_3(%arg0: i32) -> (i32, i32) {
    %c0_i32 = arith.constant 0 : i32
    %c0_i32_0 = arith.constant 0 : i32
    %c0_i32_1 = arith.constant 0 : i32
    return %c0_i32, %c0_i32_0 : i32, i32
  }
  func.func @transform_4(%arg0: i32) -> (i32, i32) {
    %c0_i32 = arith.constant 0 : i32
    %c0_i32_0 = arith.constant 0 : i32
    return %c0_i32, %arg0 : i32, i32
  }
  func.func @transform_5(%arg0: i32) -> (i32, i32) {
    %c0_i32 = arith.constant 0 : i32
    %c0_i32_0 = arith.constant 0 : i32
    return %c0_i32, %arg0 : i32, i32
  }
}

</mosaic_0001>

<llo_original>
// kernel: tpu_custom_call.1
$region0: #{tpu_custom_call.1}
  #allocation0 [shape = 'u32[]', space=smem, size = 0x4, offset = 0x4, fixed_abs, tag = 'smem constant byte address 0x4 - core index']
  #allocation1 [shape = 'u32[72,128]{1,0:T(1,128)}', space=vmem, size = 0x9000, scoped, tag = 'internal scratch']
  %s0 = inlined_call_operand.hbm [shape: f32[32,64], index: 0, kind: input, shape index: {}]
  %s1 = inlined_call_operand.hbm [shape: f32[64,768], index: 1, kind: input, shape index: {}]
  %s2 = inlined_call_operand.hbm [shape: f32[32,48], index: 2, kind: input, shape index: {}]
  %s3 = inlined_call_operand.hbm [shape: f32[4,128], index: 3, kind: input, shape index: {}]
  %s4 = inlined_call_operand.hbm [shape: f32[2,256], index: 4, kind: input, shape index: {}]
  %s5 = inlined_call_operand.hbm [shape: f32[64,256], index: 5, kind: output, shape index: {}]
  %s6 = sld [smem:[#allocation0]]
  $region73: #{tpu_custom_call.1} parent=0
    _
  %s8 = ssub.s32 1, %s6
  %s9 = scalar_select 0, %s8, %s6
  $region1: #{tpu_custom_call.1} parent=0
    #allocation2 [shape = 'u8[16384]{0}', space=vmem, size = 0x4000, scoped, tag = 'input window, operand 0, single buffered']
    #allocation3 [shape = 's32[2]{0}', space=sflag, size = 0x8, scoped, tag = 'scoped memory for tpu_custom_call.1']
    #allocation4 [shape = 's32[2]{0}', space=sflag, size = 0x8, scoped, tag = 'scoped memory for tpu_custom_call.1']
    #allocation5 [shape = 'u8[196608]{0}', space=vmem, size = 0x30000, scoped, tag = 'input window, operand 1']
    #allocation6 [shape = 's32[2]{0}', space=sflag, size = 0x8, scoped, tag = 'scoped memory for tpu_custom_call.1']
    #allocation7 [shape = 'u8[16384]{0}', space=vmem, size = 0x4000, scoped, tag = 'input window, operand 2, single buffered']
    #allocation8 [shape = 'u8[2048]{0}', space=vmem, size = 0x800, scoped, tag = 'input window, operand 3, single buffered']
    #allocation9 [shape = 's32[1]{0}', space=sflag, size = 0x4, scoped, tag = 'scoped memory for tpu_custom_call.1']
    #allocation10 [shape = 'u8[2048]{0}', space=vmem, size = 0x800, scoped, tag = 'input window, operand 4']
    #allocation11 [shape = 'u8[65536]{0}', space=vmem, size = 0x10000, scoped, tag = 'output window, operand 0']
    %10 = vsyncpa [#allocation3], 0
    %11 = vsyncpa [#allocation6], 0
    %s12 = scalar_lea.sflag [#allocation6], 1
    %13 = vsyncpa %s12, 0
    %14 = vsyncpa [#allocation9], 0
    %15 = vsyncpa [#allocation4], 0
    %s16 = scalar_lea.sflag [#allocation4], 1
    %17 = vsyncpa %s16, 0
    loop: start=0, step=1, limit=4
    $region2: #{tpu_custom_call.1} parent=1 // loop_pre_header
      _
    $region3: #{tpu_custom_call.1} parent=1 // loop_header
      %s19 = sphi 0, %s23
      %p20 = scmp.ge.s32.totalorder %s19, 4
      %s27 = sphi 0, %s27
      %s29 = sphi 0, %s27
      %s30 = sphi 0, %s29
      %s44 = sphi 0, %s30
      %s50 = sphi 0, %s52
      %s53 = sphi 0, %s50
      %s54 = sphi 0, %s53
      %s70 = sphi 0, %s54
      %s74 = sphi 0, %s74
      %s76 = sphi 0, %s74
      %s77 = sphi 0, %s76
      %s91 = sphi 0, %s77
      %s95 = sphi 0, %s95
      %s97 = sphi 0, %s95
      %s98 = sphi 0, %s97
      %s112 = sphi 0, %s98
      %s118 = sphi 0, %s120
      %s121 = sphi 0, %s118
      %s122 = sphi 0, %s121
      %s138 = sphi 0, %s122
      %s144 = sphi 0, %s146
      %s147 = sphi 0, %s144
      %s148 = sphi 0, %s147
      %s164 = sphi 0, %s148
    $region4: #{tpu_custom_call.1} parent=1 // loop_header_branch
      %22 = sbr.rel (%p20) target = $region8
    $region5: #{tpu_custom_call.1} parent=1 // loop_body
      %s24 = ssub.s32 %s19, 1
      %s25 = ssub.s32 %s19, 2
      %s26 = sadd.s32 %s19, 1
      %s28 = sadd.s32 %s27, 1
      %p31 = scmp.eq.s32.totalorder %s19, 1
      %p32 = scmp.ne.s32.totalorder %s27, %s29
      %p33 = scmp.eq.s32.totalorder %s19, 0
      %p34 = por %p32, %p33
      %p35 = scmp.ne.s32.totalorder %s27, %s29
      %p36 = scmp.eq.s32.totalorder %s24, 1
      %p37 = por %p35, %p36
      %p38 = scmp.ne.s32.totalorder %s29, %s30
      %p39 = scmp.eq.s32.totalorder %s24, 0
      %p40 = por %p38, %p39
      %p41 = scmp.ne.s32.totalorder %s29, %s30
      %p42 = scmp.eq.s32.totalorder %s25, 1
      %p43 = por %p41, %p42
      %p45 = scmp.ne.s32.totalorder %s30, %s44
      %p46 = scmp.eq.s32.totalorder %s25, 0
      %p47 = por %p45, %p46
      %s48 = ssub.s32 %s19, %s26
      %p49 = scmp.eq.s32.totalorder %s48, 0
      %s51 = sadd.s32 %s50, 1
      %s52 = scalar_select %p49, %s50, %s51
      %p55 = pneg %p49
      %p56 = scmp.eq.s32.totalorder %s19, 1
      %p57 = por %p55, %p56
      %p58 = scmp.ne.s32.totalorder %s50, %s53
      %p59 = scmp.eq.s32.totalorder %s19, 0
      %p60 = por %p58, %p59
      %p61 = scmp.ne.s32.totalorder %s50, %s53
      %p62 = scmp.eq.s32.totalorder %s24, 1
      %p63 = por %p61, %p62
      %p64 = scmp.ne.s32.totalorder %s53, %s54
      %p65 = scmp.eq.s32.totalorder %s24, 0
      %p66 = por %p64, %p65
      %p67 = scmp.ne.s32.totalorder %s53, %s54
      %p68 = scmp.eq.s32.totalorder %s25, 1
      %p69 = por %p67, %p68
      %p71 = scmp.ne.s32.totalorder %s54, %s70
      %p72 = scmp.eq.s32.totalorder %s25, 0
      %p73 = por %p71, %p72
      %s75 = sadd.s32 %s74, 1
      %p78 = scmp.eq.s32.totalorder %s19, 1
      %p79 = scmp.ne.s32.totalorder %s74, %s76
      %p80 = scmp.eq.s32.totalorder %s19, 0
      %p81 = por %p79, %p80
      %p82 = scmp.ne.s32.totalorder %s74, %s76
      %p83 = scmp.eq.s32.totalorder %s24, 1
      %p84 = por %p82, %p83
      %p85 = scmp.ne.s32.totalorder %s76, %s77
      %p86 = scmp.eq.s32.totalorder %s24, 0
      %p87 = por %p85, %p86
      %p88 = scmp.ne.s32.totalorder %s76, %s77
      %p89 = scmp.eq.s32.totalorder %s25, 1
      %p90 = por %p88, %p89
      %p92 = scmp.ne.s32.totalorder %s77, %s91
      %p93 = scmp.eq.s32.totalorder %s25, 0
      %p94 = por %p92, %p93
      %s96 = sadd.s32 %s95, 1
      %p99 = scmp.eq.s32.totalorder %s19, 1
      %p100 = scmp.ne.s32.totalorder %s95, %s97
      %p101 = scmp.eq.s32.totalorder %s19, 0
      %p102 = por %p100, %p101
      %p103 = scmp.ne.s32.totalorder %s95, %s97
      %p104 = scmp.eq.s32.totalorder %s24, 1
      %p105 = por %p103, %p104
      %p106 = scmp.ne.s32.totalorder %s97, %s98
      %p107 = scmp.eq.s32.totalorder %s24, 0
      %p108 = por %p106, %p107
      %p109 = scmp.ne.s32.totalorder %s97, %s98
      %p110 = scmp.eq.s32.totalorder %s25, 1
      %p111 = por %p109, %p110
      %p113 = scmp.ne.s32.totalorder %s98, %s112
      %p114 = scmp.eq.s32.totalorder %s25, 0
      %p115 = por %p113, %p114
      %s116 = ssub.s32 %s19, %s26
      %p117 = scmp.eq.s32.totalorder %s116, 0
      %s119 = sadd.s32 %s118, 1
      %s120 = scalar_select %p117, %s118, %s119
      %p123 = pneg %p117
      %p124 = scmp.eq.s32.totalorder %s19, 1
      %p125 = por %p123, %p124
      %p126 = scmp.ne.s32.totalorder %s118, %s121
      %p127 = scmp.eq.s32.totalorder %s19, 0
      %p128 = por %p126, %p127
      %p129 = scmp.ne.s32.totalorder %s118, %s121
      %p130 = scmp.eq.s32.totalorder %s24, 1
      %p131 = por %p129, %p130
      %p132 = scmp.ne.s32.totalorder %s121, %s122
      %p133 = scmp.eq.s32.totalorder %s24, 0
      %p134 = por %p132, %p133
      %p135 = scmp.ne.s32.totalorder %s121, %s122
      %p136 = scmp.eq.s32.totalorder %s25, 1
      %p137 = por %p135, %p136
      %p139 = scmp.ne.s32.totalorder %s122, %s138
      %p140 = scmp.eq.s32.totalorder %s25, 0
      %p141 = por %p139, %p140
      %s142 = ssub.s32 %s19, %s26
      %p143 = scmp.eq.s32.totalorder %s142, 0
      %s145 = sadd.s32 %s144, 1
      %s146 = scalar_select %p143, %s144, %s145
      %p149 = pneg %p143
      %p150 = scmp.eq.s32.totalorder %s19, 1
      %p151 = por %p149, %p150
      %p152 = scmp.ne.s32.totalorder %s144, %s147
      %p153 = scmp.eq.s32.totalorder %s19, 0
      %p154 = por %p152, %p153
      %p155 = scmp.ne.s32.totalorder %s144, %s147
      %p156 = scmp.eq.s32.totalorder %s24, 1
      %p157 = por %p155, %p156
      %p158 = scmp.ne.s32.totalorder %s147, %s148
      %p159 = scmp.eq.s32.totalorder %s24, 0
      %p160 = por %p158, %p159
      %p161 = scmp.ne.s32.totalorder %s147, %s148
      %p162 = scmp.eq.s32.totalorder %s25, 1
      %p163 = por %p161, %p162
      %p165 = scmp.ne.s32.totalorder %s148, %s164
      %p166 = scmp.eq.s32.totalorder %s25, 0
      %p167 = por %p165, %p166
      %p168 = scmp.le.s32.totalorder 1, %s19
      %p169 = scmp.lt.s32.totalorder %s19, 3
      %p170 = pnand %p168, %p169
      %p171 = pneg %p170
      // Predicated region
      $region9: #{tpu_custom_call.1} parent=5 // pred_check
        _
      $region10: #{tpu_custom_call.1} parent=5 // pred_check_branch
        %173 = sbr.rel (%p170) target = $region12
      $region11: #{tpu_custom_call.1} parent=5 // pred_region
        %s174 = ssub.s32 %s19, 1
        // Predicated region
        $region13: #{tpu_custom_call.1} parent=11 // pred_check
          %p175 = pneg %p40
        $region14: #{tpu_custom_call.1} parent=11 // pred_check_branch
          %177 = sbr.rel (%p175) target = $region16
        $region15: #{tpu_custom_call.1} parent=11 // pred_region
          %179 = vsyncadd [#allocation3], 0
          %s180 = sshll.u32 %s0, 4
          %s181 = int_to_ptr.hbm [resolvable:$true] %s180
          %s182 = sshll.u32 [#allocation2], 4
          %s183 = int_to_ptr.vmem [resolvable:$true] %s182
          %188 = dma.hbm_to_vmem [thread:$0]  %s181, 512, %s183, [#allocation3], 128, 128, 8
        $region16: #{tpu_custom_call.1} parent=11 // pred_fallthru
          _
        // Predicated region
        $region17: #{tpu_custom_call.1} parent=11 // pred_check
          %p189 = pneg %p87
        $region18: #{tpu_custom_call.1} parent=11 // pred_check_branch
          %191 = sbr.rel (%p189) target = $region20
        $region19: #{tpu_custom_call.1} parent=11 // pred_region
          %193 = vsyncadd [#allocation6], 0
          %s194 = sshll.u32 %s2, 4
          %s195 = int_to_ptr.hbm [resolvable:$true] %s194
          %s196 = sshll.u32 [#allocation7], 4
          %s197 = int_to_ptr.vmem [resolvable:$true] %s196
          %202 = dma.hbm_to_vmem [thread:$0]  %s195, 512, %s197, [#allocation6], 128, 128, 8
        $region20: #{tpu_custom_call.1} parent=11 // pred_fallthru
          _
        // Predicated region
        $region21: #{tpu_custom_call.1} parent=11 // pred_check
          %p203 = pneg %p108
        $region22: #{tpu_custom_call.1} parent=11 // pred_check_branch
          %205 = sbr.rel (%p203) target = $region24
        $region23: #{tpu_custom_call.1} parent=11 // pred_region
          %207 = vsyncadd [#allocation9], 0
          %s209 = sshll.u32 %s3, 4
          %s210 = int_to_ptr.hbm [resolvable:$true] %s209
          %s211 = sshll.u32 [#allocation8], 4
          %s212 = int_to_ptr.vmem [resolvable:$true] %s211
          %214 = dma.hbm_to_vmem [thread:$0]  %s210, 64, %s212, [#allocation9]
        $region24: #{tpu_custom_call.1} parent=11 // pred_fallthru
          _
      $region12: #{tpu_custom_call.1} parent=5 // pred_fallthru
        _
      %p215 = scmp.lt.s32.totalorder %s19, 2
      // Predicated region
      $region25: #{tpu_custom_call.1} parent=5 // pred_check
        %p216 = pneg %p215
      $region26: #{tpu_custom_call.1} parent=5 // pred_check_branch
        %218 = sbr.rel (%p216) target = $region28
      $region27: #{tpu_custom_call.1} parent=5 // pred_region
        // Predicated region
        $region29: #{tpu_custom_call.1} parent=27 // pred_check
          %p219 = pneg %p60
        $region30: #{tpu_custom_call.1} parent=27 // pred_check_branch
          %221 = sbr.rel (%p219) target = $region32
        $region31: #{tpu_custom_call.1} parent=27 // pred_region
          %s222 = sand.u32 %s19, 1
          %s223 = scalar_lea.sflag [#allocation6], %s222
          %s224 = sand.u32 %s50, 1
          %s225 = smul.addr %s224, 192
          %s226 = scalar_lea.vmem [#allocation5], %s225
          %s227 = smul.u32 3, %s19
          %229 = vsyncadd %s223, 0
          %s230 = smul.addr %s227, 8
          %s231 = scalar_lea.hbm %s1, %s230
          %s232 = sshll.u32 %s231, 4
          %s233 = int_to_ptr.hbm [resolvable:$true] %s232
          %s234 = sshll.u32 %s226, 4
          %s235 = int_to_ptr.vmem [resolvable:$true] %s234
          %240 = dma.hbm_to_vmem [thread:$0]  %s233, 3072, %s235, %s223, 768, 384, 24
        $region32: #{tpu_custom_call.1} parent=27 // pred_fallthru
          _
        // Predicated region
        $region33: #{tpu_custom_call.1} parent=27 // pred_check
          %p241 = pneg %p128
        $region34: #{tpu_custom_call.1} parent=27 // pred_check_branch
          %243 = sbr.rel (%p241) target = $region36
        $region35: #{tpu_custom_call.1} parent=27 // pred_region
          %s244 = sand.u32 %s19, 1
          %s245 = scalar_lea.sflag [#allocation3], %s244
          %s246 = sand.u32 %s118, 1
          %s247 = smul.addr %s246, 2
          %s248 = scalar_lea.vmem [#allocation10], %s247
          %250 = vsyncadd %s245, 0
          %s251 = smul.addr %s19, 2
          %s252 = scalar_lea.hbm %s4, %s251
          %s254 = sshll.u32 %s252, 4
          %s255 = int_to_ptr.hbm [resolvable:$true] %s254
          %s256 = sshll.u32 %s248, 4
          %s257 = int_to_ptr.vmem [resolvable:$true] %s256
          %259 = dma.hbm_to_vmem [thread:$0]  %s255, 32, %s257, %s245
        $region36: #{tpu_custom_call.1} parent=27 // pred_fallthru
          _
      $region28: #{tpu_custom_call.1} parent=5 // pred_fallthru
        _
      %p260 = scmp.le.s32.totalorder 1, %s19
      %p261 = scmp.lt.s32.totalorder %s19, 3
      %p262 = pnand %p260, %p261
      %p263 = pneg %p262
      // Predicated region
      $region37: #{tpu_custom_call.1} parent=5 // pred_check
        _
      $region38: #{tpu_custom_call.1} parent=5 // pred_check_branch
        %265 = sbr.rel (%p262) target = $region40
      $region39: #{tpu_custom_call.1} parent=5 // pred_region
        %s266 = ssub.s32 %s19, 1
        // Predicated region
        $region41: #{tpu_custom_call.1} parent=39 // pred_check
          %p267 = pneg %p40
        $region42: #{tpu_custom_call.1} parent=39 // pred_check_branch
          %269 = sbr.rel (%p267) target = $region44
        $region43: #{tpu_custom_call.1} parent=39 // pred_region
          %271 = dma.done [#allocation3], 512
        $region44: #{tpu_custom_call.1} parent=39 // pred_fallthru
          _
        %s272 = sand.u32 %s24, 1
        %s273 = scalar_lea.sflag [#allocation6], %s272
        %s274 = sand.u32 %s53, 1
        %s275 = smul.addr %s274, 192
        %s276 = scalar_lea.vmem [#allocation5], %s275
        // Predicated region
        $region45: #{tpu_custom_call.1} parent=39 // pred_check
          %p277 = pneg %p66
        $region46: #{tpu_custom_call.1} parent=39 // pred_check_branch
          %279 = sbr.rel (%p277) target = $region48
        $region47: #{tpu_custom_call.1} parent=39 // pred_region
          %281 = dma.done %s273, 3072
        $region48: #{tpu_custom_call.1} parent=39 // pred_fallthru
          _
        // Predicated region
        $region49: #{tpu_custom_call.1} parent=39 // pred_check
          %p282 = pneg %p87
        $region50: #{tpu_custom_call.1} parent=39 // pred_check_branch
          %284 = sbr.rel (%p282) target = $region52
        $region51: #{tpu_custom_call.1} parent=39 // pred_region
          %286 = dma.done [#allocation6], 512
        $region52: #{tpu_custom_call.1} parent=39 // pred_fallthru
          _
        // Predicated region
        $region53: #{tpu_custom_call.1} parent=39 // pred_check
          %p287 = pneg %p108
        $region54: #{tpu_custom_call.1} parent=39 // pred_check_branch
          %289 = sbr.rel (%p287) target = $region56
        $region55: #{tpu_custom_call.1} parent=39 // pred_region
          %291 = dma.done [#allocation9], 64
        $region56: #{tpu_custom_call.1} parent=39 // pred_fallthru
          _
        %s292 = sand.u32 %s24, 1
        %s293 = scalar_lea.sflag [#allocation3], %s292
        %s294 = sand.u32 %s121, 1
        %s295 = smul.addr %s294, 2
        %s296 = scalar_lea.vmem [#allocation10], %s295
        // Predicated region
        $region57: #{tpu_custom_call.1} parent=39 // pred_check
          %p297 = pneg %p134
        $region58: #{tpu_custom_call.1} parent=39 // pred_check_branch
          %299 = sbr.rel (%p297) target = $region60
        $region59: #{tpu_custom_call.1} parent=39 // pred_region
          %301 = dma.done %s293, 32
        $region60: #{tpu_custom_call.1} parent=39 // pred_fallthru
          _
        %p302 = pneg %p40
        %p303 = pneg %p37
        %s304 = sand.u32 %s24, 1
        %s305 = scalar_lea.sflag [#allocation6], %s304
        %s306 = sand.u32 %s53, 1
        %s307 = smul.addr %s306, 192
        %s308 = scalar_lea.vmem [#allocation5], %s307
        %p309 = pneg %p66
        %p310 = pneg %p63
        %p311 = pneg %p87
        %p312 = pneg %p84
        %p313 = pneg %p108
        %p314 = pneg %p105
        %s315 = sand.u32 %s24, 1
        %s316 = scalar_lea.sflag [#allocation3], %s315
        %s317 = sand.u32 %s121, 1
        %s318 = smul.addr %s317, 2
        %s319 = scalar_lea.vmem [#allocation10], %s318
        %p320 = pneg %p134
        %p321 = pneg %p131
        %p322 = pneg %p160
        %p323 = pneg %p157
        %s324 = sand.u32 %s147, 1
        %s325 = scalar_lea.sflag [#allocation4], %s324
        %s326 = sand.u32 %s147, 1
        %s327 = smul.addr %s326, 64
        %s328 = scalar_lea.vmem [#allocation11], %s327
        %s329 = smul.u32 3, %s24
        %v330 = vld [vmem:[#allocation2] sm:$0xff]
        %v331 = vld [vmem:[#allocation2 + $0x8] sm:$0xff]
        %v332 = vld [vmem:[#allocation2 + $0x10] sm:$0xff]
        %v333 = vld [vmem:[#allocation2 + $0x18] sm:$0xff]
        %v334 = vld [vmem:[%s276] sm:$0xff]
        %v335 = vld [vmem:[%s276 + $0x8] sm:$0xff]
        %v336 = vld [vmem:[%s276 + $0x10] sm:$0xff]
        %v337 = vld [vmem:[%s276 + $0x18] sm:$0xff]
        %v338 = vld [vmem:[%s276 + $0x20] sm:$0xff]
        %v339 = vld [vmem:[%s276 + $0x28] sm:$0xff]
        %v340 = vld [vmem:[%s276 + $0x30] sm:$0xff]
        %v341 = vld [vmem:[%s276 + $0x38] sm:$0xff]
        %v342 = vld [vmem:[%s276 + $0x40] sm:$0xff]
        %v343 = vld [vmem:[%s276 + $0x48] sm:$0xff]
        %v344 = vld [vmem:[%s276 + $0x50] sm:$0xff]
        %v345 = vld [vmem:[%s276 + $0x58] sm:$0xff]
        %v346 = vld [vmem:[%s276 + $0x60] sm:$0xff]
        %v347 = vld [vmem:[%s276 + $0x68] sm:$0xff]
        %v348 = vld [vmem:[%s276 + $0x70] sm:$0xff]
        %v349 = vld [vmem:[%s276 + $0x78] sm:$0xff]
        %v350 = vld [vmem:[%s276 + $0x80] sm:$0xff]
        %v351 = vld [vmem:[%s276 + $0x88] sm:$0xff]
        %v352 = vld [vmem:[%s276 + $0x90] sm:$0xff]
        %v353 = vld [vmem:[%s276 + $0x98] sm:$0xff]
        %v354 = vld [vmem:[%s276 + $0xa0] sm:$0xff]
        %v355 = vld [vmem:[%s276 + $0xa8] sm:$0xff]
        %v356 = vld [vmem:[%s276 + $0xb0] sm:$0xff]
        %v357 = vld [vmem:[%s276 + $0xb8] sm:$0xff]
        %vm358 = vcmask 523264
        %v360 = vsel %vm358, %v330, 0
        %v363 = vsel %vm358, %v331, 0
        %v366 = vsel %vm358, %v332, 0
        %v369 = vsel %vm358, %v333, 0
        %371 = vmatpush.msra.mxu0 0.0
        %372 = vmatpush.msra.mxu0 0.0
        %373 = vmatpush.msra.mxu0 0.0
        %374 = vmatpush.msra.mxu0 0.0
        %375 = vmatpush.msra.mxu0 0.0
        %376 = vmatpush.msra.mxu0 0.0
        %377 = vmatpush.msra.mxu0 0.0
        %378 = vmatpush.msra.mxu0 0.0
        %379 = vmatpush.msra.mxu0 %v355
        %380 = vmatpush.msra.mxu0 %v352
        %381 = vmatpush.msra.mxu0 %v349
        %382 = vmatpush.msra.mxu0 %v346
        %383 = vmatpush.msra.mxu0 %v343
        %384 = vmatpush.msra.mxu0 %v340
        %385 = vmatpush.msra.mxu0 %v337
        %386 = vmatpush.msra.mxu0 %v334
        %387 = vmatmul.f32.gmra.mxu0 %v360
        %v388 = vpop.f32.mrf.mxu0
        %v389 = vadd.f32 0.0, %v388
        %390 = vmatmul.f32.gmra.mxu0 %v363
        %v391 = vpop.f32.mrf.mxu0
        %v392 = vadd.f32 0.0, %v391
        %393 = vmatmul.f32.gmra.mxu0 %v366
        %v394 = vpop.f32.mrf.mxu0
        %v395 = vadd.f32 0.0, %v394
        %396 = vmatmul.f32.gmra.mxu0 %v369
        %v397 = vpop.f32.mrf.mxu0
        %v398 = vadd.f32 0.0, %v397
        %399 = vdwg.mxu0
        %400 = vmatpush.msra.mxu0 0.0
        %401 = vmatpush.msra.mxu0 0.0
        %402 = vmatpush.msra.mxu0 0.0
        %403 = vmatpush.msra.mxu0 0.0
        %404 = vmatpush.msra.mxu0 0.0
        %405 = vmatpush.msra.mxu0 0.0
        %406 = vmatpush.msra.mxu0 0.0
        %407 = vmatpush.msra.mxu0 0.0
        %408 = vmatpush.msra.mxu0 %v356
        %409 = vmatpush.msra.mxu0 %v353
        %410 = vmatpush.msra.mxu0 %v350
        %411 = vmatpush.msra.mxu0 %v347
        %412 = vmatpush.msra.mxu0 %v344
        %413 = vmatpush.msra.mxu0 %v341
        %414 = vmatpush.msra.mxu0 %v338
        %415 = vmatpush.msra.mxu0 %v335
        %416 = vmatmul.f32.gmra.mxu0 %v360
        %v417 = vpop.f32.mrf.mxu0
        %v418 = vadd.f32 0.0, %v417
        %419 = vmatmul.f32.gmra.mxu0 %v363
        %v420 = vpop.f32.mrf.mxu0
        %v421 = vadd.f32 0.0, %v420
        %422 = vmatmul.f32.gmra.mxu0 %v366
        %v423 = vpop.f32.mrf.mxu0
        %v424 = vadd.f32 0.0, %v423
        %425 = vmatmul.f32.gmra.mxu0 %v369
        %v426 = vpop.f32.mrf.mxu0
        %v427 = vadd.f32 0.0, %v426
        %428 = vdwg.mxu0
        %429 = vmatpush.msra.mxu0 0.0
        %430 = vmatpush.msra.mxu0 0.0
        %431 = vmatpush.msra.mxu0 0.0
        %432 = vmatpush.msra.mxu0 0.0
        %433 = vmatpush.msra.mxu0 0.0
        %434 = vmatpush.msra.mxu0 0.0
        %435 = vmatpush.msra.mxu0 0.0
        %436 = vmatpush.msra.mxu0 0.0
        %437 = vmatpush.msra.mxu0 %v357
        %438 = vmatpush.msra.mxu0 %v354
        %439 = vmatpush.msra.mxu0 %v351
        %440 = vmatpush.msra.mxu0 %v348
        %441 = vmatpush.msra.mxu0 %v345
        %442 = vmatpush.msra.mxu0 %v342
        %443 = vmatpush.msra.mxu0 %v339
        %444 = vmatpush.msra.mxu0 %v336
        %445 = vmatmul.f32.gmra.mxu0 %v360
        %v446 = vpop.f32.mrf.mxu0
        %v447 = vadd.f32 0.0, %v446
        %448 = vmatmul.f32.gmra.mxu0 %v363
        %v449 = vpop.f32.mrf.mxu0
        %v450 = vadd.f32 0.0, %v449
        %451 = vmatmul.f32.gmra.mxu0 %v366
        %v452 = vpop.f32.mrf.mxu0
        %v453 = vadd.f32 0.0, %v452
        %454 = vmatmul.f32.gmra.mxu0 %v369
        %v455 = vpop.f32.mrf.mxu0
        %v456 = vadd.f32 0.0, %v455
        %457 = vdwg.mxu0
        %v458 = vld [vmem:[#allocation7] sm:$0xff]
        %v459 = vld [vmem:[#allocation7 + $0x8] sm:$0xff]
        %v460 = vld [vmem:[#allocation7 + $0x10] sm:$0xff]
        %v461 = vld [vmem:[#allocation7 + $0x18] sm:$0xff]
        %vm462 = vcmask 392192
        %v464 = vsel %vm462, %v458, 0
        %v467 = vsel %vm462, %v459, 0
        %v470 = vsel %vm462, %v460, 0
        %v473 = vsel %vm462, %v461, 0
        %475 = vmatpush.msra.mxu0 0.0
        %476 = vmatpush.msra.mxu0 0.0
        %477 = vmatpush.msra.mxu0 0.0
        %478 = vmatpush.msra.mxu0 0.0
        %479 = vmatpush.msra.mxu0 0.0
        %480 = vmatpush.msra.mxu0 0.0
        %481 = vmatpush.msra.mxu0 0.0
        %482 = vmatpush.msra.mxu0 0.0
        %483 = vmatpush.msra.mxu0 0.0
        %484 = vmatpush.msra.mxu0 0.0
        %485 = vmatpush.msra.mxu0 %v450
        %486 = vmatpush.msra.mxu0 %v447
        %487 = vmatpush.msra.mxu0 %v421
        %488 = vmatpush.msra.mxu0 %v418
        %489 = vmatpush.msra.mxu0 %v392
        %490 = vmatpush.msra.mxu0 %v389
        %491 = vmatmul.f32.gmra.mxu0 %v464
        %v492 = vpop.f32.mrf.mxu0
        %v493 = vadd.f32 0.0, %v492
        %494 = vmatmul.f32.gmra.mxu0 %v467
        %v495 = vpop.f32.mrf.mxu0
        %v496 = vadd.f32 0.0, %v495
        %497 = vmatmul.f32.gmra.mxu0 %v470
        %v498 = vpop.f32.mrf.mxu0
        %v499 = vadd.f32 0.0, %v498
        %500 = vmatmul.f32.gmra.mxu0 %v473
        %v501 = vpop.f32.mrf.mxu0
        %v502 = vadd.f32 0.0, %v501
        %503 = vdwg.mxu0
        %504 = vmatpush.msra.mxu0 0.0
        %505 = vmatpush.msra.mxu0 0.0
        %506 = vmatpush.msra.mxu0 0.0
        %507 = vmatpush.msra.mxu0 0.0
        %508 = vmatpush.msra.mxu0 0.0
        %509 = vmatpush.msra.mxu0 0.0
        %510 = vmatpush.msra.mxu0 0.0
        %511 = vmatpush.msra.mxu0 0.0
        %512 = vmatpush.msra.mxu0 0.0
        %513 = vmatpush.msra.mxu0 0.0
        %514 = vmatpush.msra.mxu0 %v456
        %515 = vmatpush.msra.mxu0 %v453
        %516 = vmatpush.msra.mxu0 %v427
        %517 = vmatpush.msra.mxu0 %v424
        %518 = vmatpush.msra.mxu0 %v398
        %519 = vmatpush.msra.mxu0 %v395
        %520 = vmatmul.f32.gmra.mxu0 %v464
        %v521 = vpop.f32.mrf.mxu0
        %v522 = vadd.f32 0.0, %v521
        %523 = vmatmul.f32.gmra.mxu0 %v467
        %v524 = vpop.f32.mrf.mxu0
        %v525 = vadd.f32 0.0, %v524
        %526 = vmatmul.f32.gmra.mxu0 %v470
        %v527 = vpop.f32.mrf.mxu0
        %v528 = vadd.f32 0.0, %v527
        %529 = vmatmul.f32.gmra.mxu0 %v473
        %v530 = vpop.f32.mrf.mxu0
        %v531 = vadd.f32 0.0, %v530
        %532 = vdwg.mxu0
        %v533 = vadd.f32 %v493, %v496
        %v534 = vadd.f32 %v533, %v499
        %v535 = vadd.f32 %v534, %v502
        %v536 = vadd.f32 %v535, %v522
        %v537 = vadd.f32 %v536, %v525
        %v538 = vadd.f32 %v537, %v528
        %v539 = vadd.f32 %v538, %v531
        %v540 = vrot.slane %v539, 4
        %v541 = vadd.f32 %v539, %v540
        %v542 = vrot.slane %v541, 2
        %v543 = vadd.f32 %v541, %v542
        %v544 = vrot.slane %v543, 1
        %v545 = vadd.f32 %v543, %v544
        %v546 = vmul.f32 %v493, %v493
        %v547 = vmul.f32 %v496, %v496
        %v548 = vmul.f32 %v499, %v499
        %v549 = vmul.f32 %v502, %v502
        %v550 = vmul.f32 %v522, %v522
        %v551 = vmul.f32 %v525, %v525
        %v552 = vmul.f32 %v528, %v528
        %v553 = vmul.f32 %v531, %v531
        %v554 = vadd.f32 %v546, %v547
        %v555 = vadd.f32 %v554, %v548
        %v556 = vadd.f32 %v555, %v549
        %v557 = vadd.f32 %v556, %v550
        %v558 = vadd.f32 %v557, %v551
        %v559 = vadd.f32 %v558, %v552
        %v560 = vadd.f32 %v559, %v553
        %v561 = vrot.slane %v560, 4
        %v562 = vadd.f32 %v560, %v561
        %v563 = vrot.slane %v562, 2
        %v564 = vadd.f32 %v562, %v563
        %v565 = vrot.slane %v564, 1
        %v566 = vadd.f32 %v564, %v565
        %vm567 = vcmask 1040384
        %v568 = vsel %vm567, %v545, %v566
        %v569 = vld [vmem:[#allocation8] sm:$0xf]
        %570 = vmatpush.xpose.msra.mxu0 0.0
        %571 = vmatpush.xpose.msra.mxu0 0.0
        %572 = vmatpush.xpose.msra.mxu0 0.0
        %573 = vmatpush.xpose.msra.mxu0 0.0
        %574 = vmatpush.xpose.msra.mxu0 0.0
        %575 = vmatpush.xpose.msra.mxu0 0.0
        %576 = vmatpush.xpose.msra.mxu0 0.0
        %577 = vmatpush.xpose.msra.mxu0 0.0
        %578 = vmatpush.xpose.msra.mxu0 0.0
        %579 = vmatpush.xpose.msra.mxu0 0.0
        %580 = vmatpush.xpose.msra.mxu0 0.0
        %581 = vmatpush.xpose.msra.mxu0 0.0
        %582 = vmatpush.xpose.msra.mxu0 0.0
        %583 = vmatpush.xpose.msra.mxu0 0.0
        %584 = vmatpush.xpose.msra.mxu0 0.0
        %585 = vmatpush.xpose.msra.mxu0 %v569
        %586 = vmatmul.f32.gmra.mxu0 %v568
        %v587 = vpop.f32.mrf.mxu0
        %v588 = vadd.f32 0.0, %v587
        %589 = vdwg.mxu0
        %v590 = vrcp.pop 2048.0
        %v591 = vmul.f32 2048.0, %v590
        %v592 = vsub.f32 1.0, %v591
        %v593 = vmul.f32 %v590, %v592
        %v594 = vadd.f32 %v590, %v593
        %vm595 = vweird.f32 %v590
        %v596 = vsel %vm595, %v590, %v594
        %v597 = vmul.f32 %v588, %v596
        %vm598 = vcmask 31744
        %v600 = vsel %vm598, %v597, 0
        %vm602 = vcmask 1043456
        %v604 = vsel %vm602, %v569, 0
        %606 = vmatpush.msra.mxu0 0.0
        %607 = vmatpush.msra.mxu0 0.0
        %608 = vmatpush.msra.mxu0 0.0
        %609 = vmatpush.msra.mxu0 0.0
        %610 = vmatpush.msra.mxu0 0.0
        %611 = vmatpush.msra.mxu0 0.0
        %612 = vmatpush.msra.mxu0 0.0
        %613 = vmatpush.msra.mxu0 0.0
        %614 = vmatpush.msra.mxu0 0.0
        %615 = vmatpush.msra.mxu0 0.0
        %616 = vmatpush.msra.mxu0 0.0
        %617 = vmatpush.msra.mxu0 0.0
        %618 = vmatpush.msra.mxu0 0.0
        %619 = vmatpush.msra.mxu0 0.0
        %620 = vmatpush.msra.mxu0 0.0
        %621 = vmatpush.msra.mxu0 %v604
        %622 = vmatmul.f32.gmra.mxu0 %v600
        %v623 = vpop.f32.mrf.mxu0
        %v624 = vadd.f32 0.0, %v623
        %625 = vdwg.mxu0
        %v626 = vmul.f32 %v624, %v624
        %v628 = vrot.slane %v626, 7
        %v630 = vsub.f32 %v624, %v628
        %v631 = vld [vmem:[%s296] sm:$0x1]
        %v632 = vadd.f32 %v630, 1e-05
        %v633 = vrsqrt.pop %v632
        %v634 = vmul.f32 %v633, %v632
        %v635 = vmul.f32 %v634, %v633
        %v636 = vmul.f32 0.5, %v635
        %v637 = vsub.f32 1.5, %v636
        %v638 = vmul.f32 %v633, %v637
        %vm639 = vweird.f32 %v632
        %vm640 = vweird.f32 %v633
        %vm641 = vmor %vm639, %vm640
        %v642 = vsel %vm641, %v633, %v638
        %v644 = vrot.slane %v642, 1
        %v646 = vmul.f32 %v631, %v644
        %v647 = vld [vmem:[%s296 + $0x1] sm:$0x1]
        %v648 = vmul.f32 %v624, %v646
        %v649 = vsub.f32 %v647, %v648
        %v650 = vperm.slane %v646, 0
        %v651 = vmul.f32 %v493, %v650
        %v652 = vmul.f32 %v496, %v650
        %v653 = vmul.f32 %v499, %v650
        %v654 = vmul.f32 %v502, %v650
        %v655 = vmul.f32 %v522, %v650
        %v656 = vmul.f32 %v525, %v650
        %v657 = vmul.f32 %v528, %v650
        %v658 = vmul.f32 %v531, %v650
        %v659 = vperm.slane %v649, 0
        %v660 = vadd.f32 %v651, %v659
        %v661 = vadd.f32 %v652, %v659
        %v662 = vadd.f32 %v653, %v659
        %v663 = vadd.f32 %v654, %v659
        %v664 = vadd.f32 %v655, %v659
        %v665 = vadd.f32 %v656, %v659
        %v666 = vadd.f32 %v657, %v659
        %v667 = vadd.f32 %v658, %v659
        %v668 = vmax.f32 %v660, 0.0
        %v669 = vmax.f32 %v661, 0.0
        %v670 = vmax.f32 %v662, 0.0
        %v671 = vmax.f32 %v663, 0.0
        %v672 = vmax.f32 %v664, 0.0
        %v673 = vmax.f32 %v665, 0.0
        %v674 = vmax.f32 %v666, 0.0
        %v675 = vmax.f32 %v667, 0.0
        %676 = vst [vmem:[%s328] sm:$0xff] %v668
        %677 = vst [vmem:[%s328 + $0x8] sm:$0xff] %v669
        %678 = vst [vmem:[%s328 + $0x10] sm:$0xff] %v670
        %679 = vst [vmem:[%s328 + $0x18] sm:$0xff] %v671
        %680 = vst [vmem:[%s328 + $0x20] sm:$0xff] %v672
        %681 = vst [vmem:[%s328 + $0x28] sm:$0xff] %v673
        %682 = vst [vmem:[%s328 + $0x30] sm:$0xff] %v674
        %683 = vst [vmem:[%s328 + $0x38] sm:$0xff] %v675
        %s684 = sand.u32 %s147, 1
        %s685 = scalar_lea.sflag [#allocation4], %s684
        %s686 = sand.u32 %s147, 1
        %s687 = smul.addr %s686, 64
        %s688 = scalar_lea.vmem [#allocation11], %s687
        // Predicated region
        $region61: #{tpu_custom_call.1} parent=39 // pred_check
          %p689 = pneg %p157
        $region62: #{tpu_custom_call.1} parent=39 // pred_check_branch
          %691 = sbr.rel (%p689) target = $region64
        $region63: #{tpu_custom_call.1} parent=39 // pred_region
          %693 = vsyncadd %s685, 0
          %s694 = smul.addr %s24, 8
          %s695 = scalar_lea.hbm %s5, %s694
          %s696 = sshll.u32 %s688, 4
          %s697 = int_to_ptr.vmem [resolvable:$true] %s696
          %s698 = sshll.u32 %s695, 4
          %s699 = int_to_ptr.hbm [resolvable:$true] %s698
          %704 = dma.vmem_to_hbm [thread:$0]  %s697, 1024, %s699, %s685, 128, 256, 8
        $region64: #{tpu_custom_call.1} parent=39 // pred_fallthru
          _
      $region40: #{tpu_custom_call.1} parent=5 // pred_fallthru
        _
      %p705 = scmp.le.s32.totalorder 2, %s19
      // Predicated region
      $region65: #{tpu_custom_call.1} parent=5 // pred_check
        %p706 = pneg %p705
      $region66: #{tpu_custom_call.1} parent=5 // pred_check_branch
        %708 = sbr.rel (%p706) target = $region68
      $region67: #{tpu_custom_call.1} parent=5 // pred_region
        %s709 = ssub.s32 %s19, 2
        // Predicated region
        $region69: #{tpu_custom_call.1} parent=67 // pred_check
          %p710 = pneg %p163
        $region70: #{tpu_custom_call.1} parent=67 // pred_check_branch
          %712 = sbr.rel (%p710) target = $region72
        $region71: #{tpu_custom_call.1} parent=67 // pred_region
          %s713 = sand.u32 %s148, 1
          %s714 = scalar_lea.sflag [#allocation4], %s713
          %s715 = sand.u32 %s148, 1
          %s716 = smul.addr %s715, 64
          %s717 = scalar_lea.vmem [#allocation11], %s716
          %719 = dma.done %s714, 1024
        $region72: #{tpu_custom_call.1} parent=67 // pred_fallthru
          _
      $region68: #{tpu_custom_call.1} parent=5 // pred_fallthru
        _
    $region6: #{tpu_custom_call.1} parent=1 // loop_footer
      %s23 = sadd.s32 1, %s19
    $region7: #{tpu_custom_call.1} parent=1 // loop_footer_branch
      %18 = sbr.rel target = $region3
    $region8: #{tpu_custom_call.1} parent=1 // loop_exit
      _
    %720 = vsyncpa [#allocation3], 1
    %s721 = scalar_lea.sflag [#allocation3], 1
    %722 = vsyncpa %s721, 1
    %723 = vsyncpa [#allocation6], 1
    %s724 = scalar_lea.sflag [#allocation6], 1
    %725 = vsyncpa %s724, 1
    %726 = vsyncpa [#allocation9], 1
    %727 = vsyncpa [#allocation4], 1
    %s728 = scalar_lea.sflag [#allocation4], 1
    %729 = vsyncpa %s728, 1

</llo_original>
